<compile_context>
chip_gen: v7x
topology: tpu7x:2x2x1
jax: 0.10.0
libtpu: 0.0.40
codegen_flags: <defaults>
</compile_context>

<pallas_src>
import jax
import jax.numpy as jnp
from jax.experimental import pallas as pl
from jax.experimental.pallas import tpu as pltpu


# ----------------------------- constants / helpers --------------------------
_VMEM_LIMIT = 32 * 1024 * 1024    # explicit scoped-VMEM limit (safe on v5e/v6e/v7x)
_VMEM_BUDGET = 24 * 1024 * 1024   # headroom under the limit for double-buffering
_WRES_MAX_2XW = 16 * 1024 * 1024  # fast path if 2 x (K_pad*N_pad*2B) <= 16 MiB


def _round_up(x, m):
    return ((x + m - 1) // m) * m


def _pick_divisor_tile(padded, candidates):
    for c in candidates:
        if padded % c == 0:
            return c
    return candidates[-1]


# ----------------------------- kernels ---------------------------------------
def _linear_relu_wres_kernel(x_ref, w_ref, b_ref, o_ref):
    # x_ref: (tm, K_pad) bf16, w_ref: (K_pad, N_pad) bf16 (resident),
    # b_ref: (1, N_pad) f32, o_ref: (tm, N_pad)
    acc = jnp.dot(x_ref[...], w_ref[...], preferred_element_type=jnp.float32)
    o_ref[...] = jnp.maximum(acc + b_ref[...], 0.0).astype(o_ref.dtype)


def _linear_relu_tiled_f32_kernel(x_ref, w_ref, b_ref, o_ref):
    # f32 output: accumulate directly into the VMEM-resident output block.
    k = pl.program_id(2)

    @pl.when(k == 0)
    def _():
        o_ref[...] = jnp.zeros_like(o_ref)

    o_ref[...] += jnp.dot(x_ref[...], w_ref[...],
                          preferred_element_type=jnp.float32)

    @pl.when(k == pl.num_programs(2) - 1)
    def _():
        o_ref[...] = jnp.maximum(o_ref[...] + b_ref[...], 0.0)


def _linear_relu_tiled_acc_kernel(x_ref, w_ref, b_ref, o_ref, acc_ref):
    # Non-f32 output: keep an f32 accumulator scratch, cast at finalize.
    k = pl.program_id(2)

    @pl.when(k == 0)
    def _():
        acc_ref[...] = jnp.zeros_like(acc_ref)

    acc_ref[...] += jnp.dot(x_ref[...], w_ref[...],
                            preferred_element_type=jnp.float32)

    @pl.when(k == pl.num_programs(2) - 1)
    def _():
        o_ref[...] = jnp.maximum(acc_ref[...] + b_ref[...], 0.0).astype(o_ref.dtype)


# ----------------------------- param prep ------------------------------------
def prepare_linear_params(weight, bias, *, compute_dtype=jnp.bfloat16):
    """One-time prep: (N, K) -> (K_pad, N_pad) bf16 weight, (1, N_pad) f32 bias.

    K and N are padded to multiples of 256 (full MXU width on v6e/v7x and
    lane-dense loads/stores). Prepare once and reuse across calls.
    """
    n, k = weight.shape
    k_pad = _round_up(k, 256)
    n_pad = _round_up(n, 256)

    w_kn = weight.T.astype(compute_dtype)                 # (K, N)
    w_kn = jnp.pad(w_kn, ((0, k_pad - k), (0, n_pad - n)))

    b2d = bias.astype(jnp.float32).reshape(1, n)
    b2d = jnp.pad(b2d, ((0, 0), (0, n_pad - n)))
    return w_kn, b2d


# ----------------------------- wrappers --------------------------------------
def linear_relu_prepared(x, w_kn, b2d, *, out_features,
                         compute_dtype=jnp.bfloat16, out_dtype=jnp.float32):
    """y = relu(x @ W^T + b) along the last axis of x (W prepared as (K_pad, N_pad))."""
    *lead, k_in = x.shape
    k_pad, n_pad = w_kn.shape
    assert k_pad % 256 == 0 and n_pad % 256 == 0
    assert k_pad >= k_in and n_pad >= out_features

    m = 1
    for d in lead:
        m *= d
    m = int(m)

    x2d = x.reshape(m, k_in).astype(compute_dtype)

    flops = 2 * m * k_in * out_features
    bytes_accessed = (m * k_in * 2 + k_pad * n_pad * 2 + n_pad * 4
                      + m * out_features * jnp.dtype(out_dtype).itemsize)
    cost = pl.CostEstimate(flops=flops, transcendentals=0,
                           bytes_accessed=bytes_accessed)

    w_bytes2 = 2 * k_pad * n_pad * 2  # weight, conservatively counted double-buffered

    # ------------------- weight-resident fast path ---------------------------
    if w_bytes2 <= _WRES_MAX_2XW:
        m16 = _round_up(max(m, 16), 16)
        tm = None
        # Cap tm at 256 so M > 256 yields >= 2 parallel row blocks (v7x megacore).
        for cand in (256, 128, 64, 32, 16):
            c = min(cand, m16)
            foot = (2 * c * k_pad * 2) + w_bytes2 + (2 * c * n_pad * 4) + 2 * n_pad * 4
            if foot <= _VMEM_BUDGET:
                tm = c
                break

        if tm is not None:
            m_pad = _round_up(m, tm)
            if m_pad != m or k_pad != k_in:
                x2d_p = jnp.pad(x2d, ((0, m_pad - m), (0, k_pad - k_in)))
            else:
                x2d_p = x2d

            out2d = pl.pallas_call(
                _linear_relu_wres_kernel,
                out_shape=jax.ShapeDtypeStruct((m_pad, n_pad), out_dtype),
                grid_spec=pl.GridSpec(
                    grid=(m_pad // tm,),
                    in_specs=[
                        pl.BlockSpec((tm, k_pad), lambda i: (i, 0)),       # x rows
                        pl.BlockSpec((k_pad, n_pad), lambda i: (0, 0)),    # whole W
                        pl.BlockSpec((1, n_pad), lambda i: (0, 0)),        # bias
                    ],
                    out_specs=pl.BlockSpec((tm, n_pad), lambda i: (i, 0)),
                ),
                compiler_params=pltpu.CompilerParams(
                    dimension_semantics=("parallel",),
                    vmem_limit_bytes=_VMEM_LIMIT),
                cost_estimate=cost,
            )(x2d_p, w_kn, b2d)

            out2d = out2d[:m, :out_features]
            return out2d.reshape(*lead, out_features)

    # ------------------- tiled path (large weights) --------------------------
    tn = _pick_divisor_tile(n_pad, (2048, 1024, 512, 256))
    tk = _pick_divisor_tile(k_pad, (1024, 512, 256))

    m16 = _round_up(max(m, 16), 16)
    if m16 <= 512:
        tm = m16
    else:
        tm = 128
        for cand in (512, 256, 128):
            if (_round_up(m, cand) - m) / m <= 0.15:   # limit zero-row waste
                tm = cand
                break

    def _footprint(tm_, tn_, tk_):
        fp = (2 * tm_ * tk_ * 2 + 2 * tk_ * tn_ * 2 + 2 * tm_ * tn_ * 4
              + 2 * tn_ * 4)
        if out_dtype != jnp.float32:
            fp += tm_ * tn_ * 4          # f32 accumulator scratch
        return fp

    while _footprint(tm, tn, tk) > _VMEM_BUDGET:
        if tn > 256:
            tn //= 2
        elif tk > 256:
            tk //= 2
        elif tm > 128:
            tm //= 2
        else:
            break

    m_pad = _round_up(m, tm)
    # v7x megacore: make sure there are >= 2 parallel grid points if possible.
    if (m_pad // tm) * (n_pad // tn) == 1 and m > 16:
        tm = max(16, _round_up((m + 1) // 2, 16))
        m_pad = _round_up(m, tm)

    if m_pad != m or k_pad != k_in:
        x2d_p = jnp.pad(x2d, ((0, m_pad - m), (0, k_pad - k_in)))
    else:
        x2d_p = x2d

    grid = (m_pad // tm, n_pad // tn, k_pad // tk)

    if out_dtype == jnp.float32:
        kernel = _linear_relu_tiled_f32_kernel
        scratch = []
    else:
        kernel = _linear_relu_tiled_acc_kernel
        scratch = [pltpu.VMEM((tm, tn), jnp.float32)]

    out2d = pl.pallas_call(
        kernel,
        out_shape=jax.ShapeDtypeStruct((m_pad, n_pad), out_dtype),
        grid_spec=pl.GridSpec(
            grid=grid,
            in_specs=[
                pl.BlockSpec((tm, tk), lambda i, j, k: (i, k)),   # x tile
                pl.BlockSpec((tk, tn), lambda i, j, k: (k, j)),   # W tile
                pl.BlockSpec((1, tn), lambda i, j, k: (0, j)),    # bias tile
            ],
            out_specs=pl.BlockSpec((tm, tn), lambda i, j, k: (i, j)),
            scratch_shapes=scratch,
        ),
        compiler_params=pltpu.CompilerParams(
            dimension_semantics=("parallel", "parallel", "arbitrary"),
            vmem_limit_bytes=_VMEM_LIMIT),
        cost_estimate=cost,
    )(x2d_p, w_kn, b2d)

    out2d = out2d[:m, :out_features]
    return out2d.reshape(*lead, out_features)


def linear_relu(x, weight, bias, *, compute_dtype=jnp.bfloat16,
                out_dtype=jnp.float32):
    """Convenience path: prepare params and run (prepare once if calling often)."""
    w_kn, b2d = prepare_linear_params(weight, bias, compute_dtype=compute_dtype)
    return linear_relu_prepared(x, w_kn, b2d, out_features=weight.shape[0],
                                compute_dtype=compute_dtype, out_dtype=out_dtype)


# ----------------------------- test -----------------------------------------
if __name__ == "__main__":
    # Small shapes consistent with the module's forward (linear over last dim).
    B, C, H, K = 2, 4, 16, 32       # input (B, C, H, in_features)
    N = 32                          # out_features

    key = jax.random.PRNGKey(0)
    kx, kw, kb = jax.random.split(key, 3)

    x = jax.random.normal(kx, (B, C, H, K), dtype=jnp.float32)
    # Deterministic synthetic parameters (the torch spec's scalar weight/bias
    # are placeholders; a proper (N, K) weight matrix is used here).
    weight = jax.random.normal(kw, (N, K), dtype=jnp.float32) * 0.1
    bias = jax.random.normal(kb, (N,), dtype=jnp.float32) * 0.1

    # Prepare weight once (transpose + bf16 cast + 256-aligned pad), then run.
    w_kn, b2d = prepare_linear_params(weight, bias)
    y = linear_relu_prepared(x, w_kn, b2d, out_features=N)
    y = jax.block_until_ready(y)

    # Reference in plain JAX with the same bf16 input rounding, f32 math.
    xb = x.astype(jnp.bfloat16).astype(jnp.float32)
    wb = weight.astype(jnp.bfloat16).astype(jnp.float32)
    ref = jnp.maximum(jnp.einsum("bchk,nk->bchn", xb, wb) + bias, 0.0)

    assert y.shape == (B, C, H, N)
    assert jnp.allclose(y, ref, atol=2e-3, rtol=2e-3)

    print("KERNEL_OK")
</pallas_src>

<mosaic_0001>
module attributes {stable_mosaic.version = 11 : i64} {
  func.func @_linear_relu_wres_kernel(%arg0: i32, %arg1: memref<128x256xbf16, #tpu.memory_space<vmem>>, %arg2: memref<256x256xbf16, #tpu.memory_space<vmem>>, %arg3: memref<1x256xf32, #tpu.memory_space<vmem>>, %arg4: memref<128x256xf32, #tpu.memory_space<vmem>>) attributes {dimension_semantics = [#tpu.dimension_semantics<parallel>], iteration_bounds = array<i64: 1>, scalar_prefetch = 0 : i64, scratch_operands = 0 : i64, tpu.core_type = #tpu.core_type<tc>, window_params = [{transform_indices = @transform_0, window_bounds = array<i64: 128, 256>}, {pipeline_mode = #tpu.pipeline_mode<synchronous>, transform_indices = @transform_1, window_bounds = array<i64: 256, 256>}, {pipeline_mode = #tpu.pipeline_mode<synchronous>, transform_indices = @transform_2, window_bounds = array<i64: 1, 256>}, {transform_indices = @transform_3, window_bounds = array<i64: 128, 256>}]} {
    %c0 = arith.constant 0 : index
    %c0_0 = arith.constant 0 : index
    %0 = vector.load %arg1[%c0, %c0_0] : memref<128x256xbf16, #tpu.memory_space<vmem>>, vector<128x256xbf16>
    %c0_1 = arith.constant 0 : index
    %c0_2 = arith.constant 0 : index
    %1 = vector.load %arg2[%c0_1, %c0_2] : memref<256x256xbf16, #tpu.memory_space<vmem>>, vector<256x256xbf16>
    %cst = arith.constant dense<0.000000e+00> : vector<128x256xf32>
    %2 = tpu.matmul %0, %1, %cst {dimension_numbers = #tpu.dot_dimension_numbers<[1], [0], [0], [1], [0, 0, 1, 1], [], []>} : vector<128x256xbf16>, vector<256x256xbf16>, vector<128x256xf32> -> vector<128x256xf32>
    %c0_3 = arith.constant 0 : index
    %c0_4 = arith.constant 0 : index
    %3 = vector.load %arg3[%c0_3, %c0_4] : memref<1x256xf32, #tpu.memory_space<vmem>>, vector<1x256xf32>
    %4 = vector.broadcast %3 : vector<1x256xf32> to vector<128x256xf32>
    %5 = arith.addf %2, %4 : vector<128x256xf32>
    %cst_5 = arith.constant 0.000000e+00 : f32
    %6 = vector.broadcast %cst_5 : f32 to vector<128x256xf32>
    %7 = arith.maximumf %5, %6 : vector<128x256xf32>
    %c0_6 = arith.constant 0 : index
    %c0_7 = arith.constant 0 : index
    %8 = vector.load %arg4[%c0_6, %c0_7] : memref<128x256xf32, #tpu.memory_space<vmem>>, vector<128x256xf32>
    tpu.vector_store %arg4[%c0_6, %c0_7], %7 {strides = array<i32>} : memref<128x256xf32, #tpu.memory_space<vmem>>, vector<128x256xf32>,
    return
  }
  func.func @transform_0(%arg0: i32) -> (i32, i32) {
    %c0_i32 = arith.constant 0 : i32
    %c0_i32_0 = arith.constant 0 : i32
    return %arg0, %c0_i32 : i32, i32
  }
  func.func @transform_1(%arg0: i32) -> (i32, i32) {
    %c0_i32 = arith.constant 0 : i32
    %c0_i32_0 = arith.constant 0 : i32
    %c0_i32_1 = arith.constant 0 : i32
    return %c0_i32, %c0_i32_0 : i32, i32
  }
  func.func @transform_2(%arg0: i32) -> (i32, i32) {
    %c0_i32 = arith.constant 0 : i32
    %c0_i32_0 = arith.constant 0 : i32
    %c0_i32_1 = arith.constant 0 : i32
    return %c0_i32, %c0_i32_0 : i32, i32
  }
  func.func @transform_3(%arg0: i32) -> (i32, i32) {
    %c0_i32 = arith.constant 0 : i32
    %c0_i32_0 = arith.constant 0 : i32
    return %arg0, %c0_i32 : i32, i32
  }
}

</mosaic_0001>

<llo_original>
// kernel: tpu_custom_call.1
$region0: #{tpu_custom_call.1}
  #allocation0 [shape = 'u32[]', space=smem, size = 0x4, offset = 0x4, fixed_abs, tag = 'smem constant byte address 0x4 - core index']
  #allocation1 [shape = 'u32[144,128]{1,0:T(1,128)}', space=vmem, size = 0x12000, scoped, tag = 'internal scratch']
  %s0 = inlined_call_operand.hbm [shape: bf16[128,256], index: 0, kind: input, shape index: {}]
  %s1 = inlined_call_operand.hbm [shape: bf16[256,256], index: 1, kind: input, shape index: {}]
  %s2 = inlined_call_operand.vmem [shape: f32[1,256], index: 2, kind: input, shape index: {}]
  %s3 = inlined_call_operand.hbm [shape: f32[128,256], index: 3, kind: output, shape index: {}]
  %s4 = sld [smem:[#allocation0]]
  $region30: #{tpu_custom_call.1} parent=0
    _
  %s6 = ssub.s32 1, %s4
  %s7 = scalar_select 0, %s6, %s4
  $region1: #{tpu_custom_call.1} parent=0
    #allocation2 [shape = 'u8[65536]{0}', space=vmem, size = 0x10000, scoped, tag = 'input window, operand 0, single buffered']
    #allocation3 [shape = 's32[1]{0}', space=sflag, size = 0x4, scoped, tag = 'scoped memory for tpu_custom_call.1']
    #allocation4 [shape = 's32[1]{0}', space=sflag, size = 0x4, scoped, tag = 'scoped memory for tpu_custom_call.1']
    #allocation5 [shape = 'u8[131072]{0}', space=vmem, size = 0x20000, scoped, tag = 'input window, operand 1, single buffered']
    #allocation6 [shape = 's32[1]{0}', space=sflag, size = 0x4, scoped, tag = 'scoped memory for tpu_custom_call.1']
    #allocation7 [shape = 'u8[131072]{0}', space=vmem, size = 0x20000, scoped, tag = 'output window, operand 0, single buffered']
    %8 = vsyncpa [#allocation3], 0
    %9 = vsyncpa [#allocation6], 0
    %10 = vsyncpa [#allocation4], 0
    // Predicated region
    $region2: #{tpu_custom_call.1} parent=1 // pred_check
      _
    $region3: #{tpu_custom_call.1} parent=1 // pred_check_branch
      %12 = sbr.rel (0) target = $region5
    $region4: #{tpu_custom_call.1} parent=1 // pred_region
      %s14 = ssub.s32 2048, 2048
      %15 = vsyncadd [#allocation3], %s14
      %s16 = sshll.u32 [#allocation2], 4
      %s17 = int_to_ptr.vmem [resolvable:$true] %s16
      %22 = dma.hbm_to_vmem [thread:$0]  %s0, 2048, %s17, [#allocation3], 128, 128, 8
    $region5: #{tpu_custom_call.1} parent=1 // pred_fallthru
      _
    // Predicated region
    $region6: #{tpu_custom_call.1} parent=1 // pred_check
      _
    $region7: #{tpu_custom_call.1} parent=1 // pred_check_branch
      %24 = sbr.rel (0) target = $region9
    $region8: #{tpu_custom_call.1} parent=1 // pred_region
      %s26 = ssub.s32 4096, 4096
      %27 = vsyncadd [#allocation6], %s26
      %s28 = sshll.u32 [#allocation5], 4
      %s29 = int_to_ptr.vmem [resolvable:$true] %s28
      %34 = dma.hbm_to_vmem [thread:$0]  %s1, 4096, %s29, [#allocation6], 128, 128, 8
    $region9: #{tpu_custom_call.1} parent=1 // pred_fallthru
      _
    // Predicated region
    $region10: #{tpu_custom_call.1} parent=1 // pred_check
      _
    $region11: #{tpu_custom_call.1} parent=1 // pred_check_branch
      %36 = sbr.rel (0) target = $region13
    $region12: #{tpu_custom_call.1} parent=1 // pred_region
      _
    $region13: #{tpu_custom_call.1} parent=1 // pred_fallthru
      _
    // Predicated region
    $region14: #{tpu_custom_call.1} parent=1 // pred_check
      _
    $region15: #{tpu_custom_call.1} parent=1 // pred_check_branch
      %38 = sbr.rel (0) target = $region17
    $region16: #{tpu_custom_call.1} parent=1 // pred_region
      %39 = dma.done [#allocation3], 2048
    $region17: #{tpu_custom_call.1} parent=1 // pred_fallthru
      _
    // Predicated region
    $region18: #{tpu_custom_call.1} parent=1 // pred_check
      _
    $region19: #{tpu_custom_call.1} parent=1 // pred_check_branch
      %41 = sbr.rel (0) target = $region21
    $region20: #{tpu_custom_call.1} parent=1 // pred_region
      %42 = dma.done [#allocation6], 4096
    $region21: #{tpu_custom_call.1} parent=1 // pred_fallthru
      _
    %v43 = vld [vmem:[#allocation2] sm:$0xff]
    %v44 = vld [vmem:[#allocation2 + $0x8] sm:$0xff]
    %v45 = vld [vmem:[#allocation2 + $0x10] sm:$0xff]
    %v46 = vld [vmem:[#allocation2 + $0x18] sm:$0xff]
    %v47 = vld [vmem:[#allocation2 + $0x20] sm:$0xff]
    %v48 = vld [vmem:[#allocation2 + $0x28] sm:$0xff]
    %v49 = vld [vmem:[#allocation2 + $0x30] sm:$0xff]
    %v50 = vld [vmem:[#allocation2 + $0x38] sm:$0xff]
    %v51 = vld [vmem:[#allocation2 + $0x40] sm:$0xff]
    %v52 = vld [vmem:[#allocation2 + $0x48] sm:$0xff]
    %v53 = vld [vmem:[#allocation2 + $0x50] sm:$0xff]
    %v54 = vld [vmem:[#allocation2 + $0x58] sm:$0xff]
    %v55 = vld [vmem:[#allocation2 + $0x60] sm:$0xff]
    %v56 = vld [vmem:[#allocation2 + $0x68] sm:$0xff]
    %v57 = vld [vmem:[#allocation2 + $0x70] sm:$0xff]
    %v58 = vld [vmem:[#allocation2 + $0x78] sm:$0xff]
    %v59 = vld [vmem:[#allocation5] sm:$0xff]
    %v60 = vld [vmem:[#allocation5 + $0x8] sm:$0xff]
    %v61 = vld [vmem:[#allocation5 + $0x10] sm:$0xff]
    %v62 = vld [vmem:[#allocation5 + $0x18] sm:$0xff]
    %v63 = vld [vmem:[#allocation5 + $0x20] sm:$0xff]
    %v64 = vld [vmem:[#allocation5 + $0x28] sm:$0xff]
    %v65 = vld [vmem:[#allocation5 + $0x30] sm:$0xff]
    %v66 = vld [vmem:[#allocation5 + $0x38] sm:$0xff]
    %v67 = vld [vmem:[#allocation5 + $0x40] sm:$0xff]
    %v68 = vld [vmem:[#allocation5 + $0x48] sm:$0xff]
    %v69 = vld [vmem:[#allocation5 + $0x50] sm:$0xff]
    %v70 = vld [vmem:[#allocation5 + $0x58] sm:$0xff]
    %v71 = vld [vmem:[#allocation5 + $0x60] sm:$0xff]
    %v72 = vld [vmem:[#allocation5 + $0x68] sm:$0xff]
    %v73 = vld [vmem:[#allocation5 + $0x70] sm:$0xff]
    %v74 = vld [vmem:[#allocation5 + $0x78] sm:$0xff]
    %v75 = vld [vmem:[#allocation5 + $0x80] sm:$0xff]
    %v76 = vld [vmem:[#allocation5 + $0x88] sm:$0xff]
    %v77 = vld [vmem:[#allocation5 + $0x90] sm:$0xff]
    %v78 = vld [vmem:[#allocation5 + $0x98] sm:$0xff]
    %v79 = vld [vmem:[#allocation5 + $0xa0] sm:$0xff]
    %v80 = vld [vmem:[#allocation5 + $0xa8] sm:$0xff]
    %v81 = vld [vmem:[#allocation5 + $0xb0] sm:$0xff]
    %v82 = vld [vmem:[#allocation5 + $0xb8] sm:$0xff]
    %v83 = vld [vmem:[#allocation5 + $0xc0] sm:$0xff]
    %v84 = vld [vmem:[#allocation5 + $0xc8] sm:$0xff]
    %v85 = vld [vmem:[#allocation5 + $0xd0] sm:$0xff]
    %v86 = vld [vmem:[#allocation5 + $0xd8] sm:$0xff]
    %v87 = vld [vmem:[#allocation5 + $0xe0] sm:$0xff]
    %v88 = vld [vmem:[#allocation5 + $0xe8] sm:$0xff]
    %v89 = vld [vmem:[#allocation5 + $0xf0] sm:$0xff]
    %v90 = vld [vmem:[#allocation5 + $0xf8] sm:$0xff]
    %v91 = vld [vmem:[%s2] sm:$0x3]
    %v93 = vlaneseq
    %v94 = vshrl.u32 %v93, 7
    %v95 = vsub.s32 0, %v94
    %v96 = vrot.slane %v91, %v95
    %v97 = vlaneseq
    %v98 = vshrl.u32 %v97, 7
    %v99 = vsub.s32 1, %v98
    %v100 = vrot.slane %v91, %v99
    %v119 = vunpack.c.l.b16 %v43
    %v120 = vunpack.c.h.b16 %v43
    %v121 = vunpack.c.l.b16 %v44
    %v122 = vunpack.c.h.b16 %v44
    %v123 = vunpack.c.l.b16 %v45
    %v124 = vunpack.c.h.b16 %v45
    %v125 = vunpack.c.l.b16 %v46
    %v126 = vunpack.c.h.b16 %v46
    %v127 = vunpack.c.l.b16 %v47
    %v128 = vunpack.c.h.b16 %v47
    %v129 = vunpack.c.l.b16 %v48
    %v130 = vunpack.c.h.b16 %v48
    %v131 = vunpack.c.l.b16 %v49
    %v132 = vunpack.c.h.b16 %v49
    %v133 = vunpack.c.l.b16 %v50
    %v134 = vunpack.c.h.b16 %v50
    %v135 = vunpack.c.l.b16 %v51
    %v136 = vunpack.c.h.b16 %v51
    %v137 = vunpack.c.l.b16 %v52
    %v138 = vunpack.c.h.b16 %v52
    %v139 = vunpack.c.l.b16 %v53
    %v140 = vunpack.c.h.b16 %v53
    %v141 = vunpack.c.l.b16 %v54
    %v142 = vunpack.c.h.b16 %v54
    %v143 = vunpack.c.l.b16 %v55
    %v144 = vunpack.c.h.b16 %v55
    %v145 = vunpack.c.l.b16 %v56
    %v146 = vunpack.c.h.b16 %v56
    %v147 = vunpack.c.l.b16 %v57
    %v148 = vunpack.c.h.b16 %v57
    %v149 = vunpack.c.l.b16 %v58
    %v150 = vunpack.c.h.b16 %v58
    %v151 = vpack.c.b16 %v121, %v119
    %v152 = vpack.c.b16 %v122, %v120
    %v153 = vpack.c.b16 %v125, %v123
    %v154 = vpack.c.b16 %v126, %v124
    %v155 = vpack.c.b16 %v129, %v127
    %v156 = vpack.c.b16 %v130, %v128
    %v157 = vpack.c.b16 %v133, %v131
    %v158 = vpack.c.b16 %v134, %v132
    %v159 = vpack.c.b16 %v137, %v135
    %v160 = vpack.c.b16 %v138, %v136
    %v161 = vpack.c.b16 %v141, %v139
    %v162 = vpack.c.b16 %v142, %v140
    %v163 = vpack.c.b16 %v145, %v143
    %v164 = vpack.c.b16 %v146, %v144
    %v165 = vpack.c.b16 %v149, %v147
    %v166 = vpack.c.b16 %v150, %v148
    %v215 = vunpack.c.l.b16 %v59
    %v216 = vunpack.c.h.b16 %v59
    %v217 = vunpack.c.l.b16 %v60
    %v218 = vunpack.c.h.b16 %v60
    %v219 = vunpack.c.l.b16 %v61
    %v220 = vunpack.c.h.b16 %v61
    %v221 = vunpack.c.l.b16 %v62
    %v222 = vunpack.c.h.b16 %v62
    %v223 = vunpack.c.l.b16 %v63
    %v224 = vunpack.c.h.b16 %v63
    %v225 = vunpack.c.l.b16 %v64
    %v226 = vunpack.c.h.b16 %v64
    %v227 = vunpack.c.l.b16 %v65
    %v228 = vunpack.c.h.b16 %v65
    %v229 = vunpack.c.l.b16 %v66
    %v230 = vunpack.c.h.b16 %v66
    %v231 = vunpack.c.l.b16 %v67
    %v232 = vunpack.c.h.b16 %v67
    %v233 = vunpack.c.l.b16 %v68
    %v234 = vunpack.c.h.b16 %v68
    %v235 = vunpack.c.l.b16 %v69
    %v236 = vunpack.c.h.b16 %v69
    %v237 = vunpack.c.l.b16 %v70
    %v238 = vunpack.c.h.b16 %v70
    %v239 = vunpack.c.l.b16 %v71
    %v240 = vunpack.c.h.b16 %v71
    %v241 = vunpack.c.l.b16 %v72
    %v242 = vunpack.c.h.b16 %v72
    %v243 = vunpack.c.l.b16 %v73
    %v244 = vunpack.c.h.b16 %v73
    %v245 = vunpack.c.l.b16 %v74
    %v246 = vunpack.c.h.b16 %v74
    %v247 = vunpack.c.l.b16 %v75
    %v248 = vunpack.c.h.b16 %v75
    %v249 = vunpack.c.l.b16 %v76
    %v250 = vunpack.c.h.b16 %v76
    %v251 = vunpack.c.l.b16 %v77
    %v252 = vunpack.c.h.b16 %v77
    %v253 = vunpack.c.l.b16 %v78
    %v254 = vunpack.c.h.b16 %v78
    %v255 = vunpack.c.l.b16 %v79
    %v256 = vunpack.c.h.b16 %v79
    %v257 = vunpack.c.l.b16 %v80
    %v258 = vunpack.c.h.b16 %v80
    %v259 = vunpack.c.l.b16 %v81
    %v260 = vunpack.c.h.b16 %v81
    %v261 = vunpack.c.l.b16 %v82
    %v262 = vunpack.c.h.b16 %v82
    %v263 = vunpack.c.l.b16 %v83
    %v264 = vunpack.c.h.b16 %v83
    %v265 = vunpack.c.l.b16 %v84
    %v266 = vunpack.c.h.b16 %v84
    %v267 = vunpack.c.l.b16 %v85
    %v268 = vunpack.c.h.b16 %v85
    %v269 = vunpack.c.l.b16 %v86
    %v270 = vunpack.c.h.b16 %v86
    %v271 = vunpack.c.l.b16 %v87
    %v272 = vunpack.c.h.b16 %v87
    %v273 = vunpack.c.l.b16 %v88
    %v274 = vunpack.c.h.b16 %v88
    %v275 = vunpack.c.l.b16 %v89
    %v276 = vunpack.c.h.b16 %v89
    %v277 = vunpack.c.l.b16 %v90
    %v278 = vunpack.c.h.b16 %v90
    %v279 = vpack.c.b16 %v217, %v215
    %v280 = vpack.c.b16 %v218, %v216
    %v281 = vpack.c.b16 %v221, %v219
    %v282 = vpack.c.b16 %v222, %v220
    %v283 = vpack.c.b16 %v225, %v223
    %v284 = vpack.c.b16 %v226, %v224
    %v285 = vpack.c.b16 %v229, %v227
    %v286 = vpack.c.b16 %v230, %v228
    %v287 = vpack.c.b16 %v233, %v231
    %v288 = vpack.c.b16 %v234, %v232
    %v289 = vpack.c.b16 %v237, %v235
    %v290 = vpack.c.b16 %v238, %v236
    %v291 = vpack.c.b16 %v241, %v239
    %v292 = vpack.c.b16 %v242, %v240
    %v293 = vpack.c.b16 %v245, %v243
    %v294 = vpack.c.b16 %v246, %v244
    %v295 = vpack.c.b16 %v249, %v247
    %v296 = vpack.c.b16 %v250, %v248
    %v297 = vpack.c.b16 %v253, %v251
    %v298 = vpack.c.b16 %v254, %v252
    %v299 = vpack.c.b16 %v257, %v255
    %v300 = vpack.c.b16 %v258, %v256
    %v301 = vpack.c.b16 %v261, %v259
    %v302 = vpack.c.b16 %v262, %v260
    %v303 = vpack.c.b16 %v265, %v263
    %v304 = vpack.c.b16 %v266, %v264
    %v305 = vpack.c.b16 %v269, %v267
    %v306 = vpack.c.b16 %v270, %v268
    %v307 = vpack.c.b16 %v273, %v271
    %v308 = vpack.c.b16 %v274, %v272
    %v309 = vpack.c.b16 %v277, %v275
    %v310 = vpack.c.b16 %v278, %v276
    %343 = vmatprep.subr.bf16.mxu0 %v280
    %344 = vmatpush1.bf16.msra.mxu0 %v279
    %345 = vmatprep.subr.bf16.mxu0 %v282
    %346 = vmatpush1.bf16.msra.mxu0 %v281
    %347 = vmatprep.subr.bf16.mxu0 %v284
    %348 = vmatpush1.bf16.msra.mxu0 %v283
    %349 = vmatprep.subr.bf16.mxu0 %v286
    %350 = vmatpush1.bf16.msra.mxu0 %v285
    %351 = vmatprep.subr.bf16.mxu0 %v288
    %352 = vmatpush1.bf16.msra.mxu0 %v287
    %353 = vmatprep.subr.bf16.mxu0 %v290
    %354 = vmatpush1.bf16.msra.mxu0 %v289
    %355 = vmatprep.subr.bf16.mxu0 %v292
    %356 = vmatpush1.bf16.msra.mxu0 %v291
    %357 = vmatprep.subr.bf16.mxu0 %v294
    %358 = vmatpush1.bf16.msra.mxu0 %v293
    %359 = vmatprep.subr.bf16.mxu0 %v296
    %360 = vmatpush1.bf16.msra.mxu0 %v295
    %361 = vmatprep.subr.bf16.mxu0 %v298
    %362 = vmatpush1.bf16.msra.mxu0 %v297
    %363 = vmatprep.subr.bf16.mxu0 %v300
    %364 = vmatpush1.bf16.msra.mxu0 %v299
    %365 = vmatprep.subr.bf16.mxu0 %v302
    %366 = vmatpush1.bf16.msra.mxu0 %v301
    %367 = vmatprep.subr.bf16.mxu0 %v304
    %368 = vmatpush1.bf16.msra.mxu0 %v303
    %369 = vmatprep.subr.bf16.mxu0 %v306
    %370 = vmatpush1.bf16.msra.mxu0 %v305
    %371 = vmatprep.subr.bf16.mxu0 %v308
    %372 = vmatpush1.bf16.msra.mxu0 %v307
    %373 = vmatprep.subr.bf16.mxu0 %v310
    %374 = vmatpush1.bf16.msra.mxu0 %v309
    %375 = vmatprep.mubr.bf16.mxu0 %v152
    %376 = vmatmul.mubr.bf16.gmra.mrb[0].mxu0 %v151
    %v377 = vpop.f32.mrb[0].mxu0
    %v378 = vadd.f32 %v96, %v377
    %v379 = vpop.f32.mrb[0].mxu0
    %v380 = vadd.f32 %v100, %v379
    %v381 = vpop.f32.mrb[0].mxu0
    %v382 = vadd.f32 %v96, %v381
    %v383 = vpop.f32.mrb[0].mxu0
    %v384 = vadd.f32 %v100, %v383
    %385 = vmatprep.mubr.bf16.mxu0 %v154
    %386 = vmatmul.mubr.bf16.gmra.mrb[0].mxu0 %v153
    %v387 = vpop.f32.mrb[0].mxu0
    %v388 = vadd.f32 %v96, %v387
    %v389 = vpop.f32.mrb[0].mxu0
    %v390 = vadd.f32 %v100, %v389
    %v391 = vpop.f32.mrb[0].mxu0
    %v392 = vadd.f32 %v96, %v391
    %v393 = vpop.f32.mrb[0].mxu0
    %v394 = vadd.f32 %v100, %v393
    %395 = vmatprep.mubr.bf16.mxu0 %v156
    %396 = vmatmul.mubr.bf16.gmra.mrb[0].mxu0 %v155
    %v397 = vpop.f32.mrb[0].mxu0
    %v398 = vadd.f32 %v96, %v397
    %v399 = vpop.f32.mrb[0].mxu0
    %v400 = vadd.f32 %v100, %v399
    %v401 = vpop.f32.mrb[0].mxu0
    %v402 = vadd.f32 %v96, %v401
    %v403 = vpop.f32.mrb[0].mxu0
    %v404 = vadd.f32 %v100, %v403
    %405 = vmatprep.mubr.bf16.mxu0 %v158
    %406 = vmatmul.mubr.bf16.gmra.mrb[0].mxu0 %v157
    %v407 = vpop.f32.mrb[0].mxu0
    %v408 = vadd.f32 %v96, %v407
    %v409 = vpop.f32.mrb[0].mxu0
    %v410 = vadd.f32 %v100, %v409
    %v411 = vpop.f32.mrb[0].mxu0
    %v412 = vadd.f32 %v96, %v411
    %v413 = vpop.f32.mrb[0].mxu0
    %v414 = vadd.f32 %v100, %v413
    %415 = vmatprep.mubr.bf16.mxu0 %v160
    %416 = vmatmul.mubr.bf16.gmra.mrb[0].mxu0 %v159
    %v417 = vpop.f32.mrb[0].mxu0
    %v418 = vadd.f32 %v96, %v417
    %v419 = vpop.f32.mrb[0].mxu0
    %v420 = vadd.f32 %v100, %v419
    %v421 = vpop.f32.mrb[0].mxu0
    %v422 = vadd.f32 %v96, %v421
    %v423 = vpop.f32.mrb[0].mxu0
    %v424 = vadd.f32 %v100, %v423
    %425 = vmatprep.mubr.bf16.mxu0 %v162
    %426 = vmatmul.mubr.bf16.gmra.mrb[0].mxu0 %v161
    %v427 = vpop.f32.mrb[0].mxu0
    %v428 = vadd.f32 %v96, %v427
    %v429 = vpop.f32.mrb[0].mxu0
    %v430 = vadd.f32 %v100, %v429
    %v431 = vpop.f32.mrb[0].mxu0
    %v432 = vadd.f32 %v96, %v431
    %v433 = vpop.f32.mrb[0].mxu0
    %v434 = vadd.f32 %v100, %v433
    %435 = vmatprep.mubr.bf16.mxu0 %v164
    %436 = vmatmul.mubr.bf16.gmra.mrb[0].mxu0 %v163
    %v437 = vpop.f32.mrb[0].mxu0
    %v438 = vadd.f32 %v96, %v437
    %v439 = vpop.f32.mrb[0].mxu0
    %v440 = vadd.f32 %v100, %v439
    %v441 = vpop.f32.mrb[0].mxu0
    %v442 = vadd.f32 %v96, %v441
    %v443 = vpop.f32.mrb[0].mxu0
    %v444 = vadd.f32 %v100, %v443
    %445 = vmatprep.mubr.bf16.mxu0 %v166
    %446 = vmatmul.mubr.bf16.gmra.mrb[0].mxu0 %v165
    %v447 = vpop.f32.mrb[0].mxu0
    %v448 = vadd.f32 %v96, %v447
    %v449 = vpop.f32.mrb[0].mxu0
    %v450 = vadd.f32 %v100, %v449
    %v451 = vpop.f32.mrb[0].mxu0
    %v452 = vadd.f32 %v96, %v451
    %v453 = vpop.f32.mrb[0].mxu0
    %v454 = vadd.f32 %v100, %v453
    %455 = vdwg.mxu0
    %v456 = vmax.f32 %v378, 0.0
    %v457 = vmax.f32 %v380, 0.0
    %v458 = vmax.f32 %v382, 0.0
    %v459 = vmax.f32 %v384, 0.0
    %v460 = vmax.f32 %v388, 0.0
    %v461 = vmax.f32 %v390, 0.0
    %v462 = vmax.f32 %v392, 0.0
    %v463 = vmax.f32 %v394, 0.0
    %v464 = vmax.f32 %v398, 0.0
    %v465 = vmax.f32 %v400, 0.0
    %v466 = vmax.f32 %v402, 0.0
    %v467 = vmax.f32 %v404, 0.0
    %v468 = vmax.f32 %v408, 0.0
    %v469 = vmax.f32 %v410, 0.0
    %v470 = vmax.f32 %v412, 0.0
    %v471 = vmax.f32 %v414, 0.0
    %v472 = vmax.f32 %v418, 0.0
    %v473 = vmax.f32 %v420, 0.0
    %v474 = vmax.f32 %v422, 0.0
    %v475 = vmax.f32 %v424, 0.0
    %v476 = vmax.f32 %v428, 0.0
    %v477 = vmax.f32 %v430, 0.0
    %v478 = vmax.f32 %v432, 0.0
    %v479 = vmax.f32 %v434, 0.0
    %v480 = vmax.f32 %v438, 0.0
    %v481 = vmax.f32 %v440, 0.0
    %v482 = vmax.f32 %v442, 0.0
    %v483 = vmax.f32 %v444, 0.0
    %v484 = vmax.f32 %v448, 0.0
    %v485 = vmax.f32 %v450, 0.0
    %v486 = vmax.f32 %v452, 0.0
    %v487 = vmax.f32 %v454, 0.0
    %488 = vst [vmem:[#allocation7] sm:$0xff] %v456
    %489 = vst [vmem:[#allocation7 + $0x8] sm:$0xff] %v457
    %490 = vst [vmem:[#allocation7 + $0x10] sm:$0xff] %v458
    %491 = vst [vmem:[#allocation7 + $0x18] sm:$0xff] %v459
    %492 = vst [vmem:[#allocation7 + $0x20] sm:$0xff] %v460
    %493 = vst [vmem:[#allocation7 + $0x28] sm:$0xff] %v461
    %494 = vst [vmem:[#allocation7 + $0x30] sm:$0xff] %v462
    %495 = vst [vmem:[#allocation7 + $0x38] sm:$0xff] %v463
    %496 = vst [vmem:[#allocation7 + $0x40] sm:$0xff] %v464
    %497 = vst [vmem:[#allocation7 + $0x48] sm:$0xff] %v465
    %498 = vst [vmem:[#allocation7 + $0x50] sm:$0xff] %v466
    %499 = vst [vmem:[#allocation7 + $0x58] sm:$0xff] %v467
    %500 = vst [vmem:[#allocation7 + $0x60] sm:$0xff] %v468
    %501 = vst [vmem:[#allocation7 + $0x68] sm:$0xff] %v469
    %502 = vst [vmem:[#allocation7 + $0x70] sm:$0xff] %v470
    %503 = vst [vmem:[#allocation7 + $0x78] sm:$0xff] %v471
    %504 = vst [vmem:[#allocation7 + $0x80] sm:$0xff] %v472
    %505 = vst [vmem:[#allocation7 + $0x88] sm:$0xff] %v473
    %506 = vst [vmem:[#allocation7 + $0x90] sm:$0xff] %v474
    %507 = vst [vmem:[#allocation7 + $0x98] sm:$0xff] %v475
    %508 = vst [vmem:[#allocation7 + $0xa0] sm:$0xff] %v476
    %509 = vst [vmem:[#allocation7 + $0xa8] sm:$0xff] %v477
    %510 = vst [vmem:[#allocation7 + $0xb0] sm:$0xff] %v478
    %511 = vst [vmem:[#allocation7 + $0xb8] sm:$0xff] %v479
    %512 = vst [vmem:[#allocation7 + $0xc0] sm:$0xff] %v480
    %513 = vst [vmem:[#allocation7 + $0xc8] sm:$0xff] %v481
    %514 = vst [vmem:[#allocation7 + $0xd0] sm:$0xff] %v482
    %515 = vst [vmem:[#allocation7 + $0xd8] sm:$0xff] %v483
    %516 = vst [vmem:[#allocation7 + $0xe0] sm:$0xff] %v484
    %517 = vst [vmem:[#allocation7 + $0xe8] sm:$0xff] %v485
    %518 = vst [vmem:[#allocation7 + $0xf0] sm:$0xff] %v486
    %519 = vst [vmem:[#allocation7 + $0xf8] sm:$0xff] %v487
    // Predicated region
    $region22: #{tpu_custom_call.1} parent=1 // pred_check
      _
    $region23: #{tpu_custom_call.1} parent=1 // pred_check_branch
      %521 = sbr.rel (0) target = $region25
    $region24: #{tpu_custom_call.1} parent=1 // pred_region
      %s523 = ssub.s32 4096, 4096
      %524 = vsyncadd [#allocation4], %s523
      %s525 = sshll.u32 [#allocation7], 4
      %s526 = int_to_ptr.vmem [resolvable:$true] %s525
      %531 = dma.vmem_to_hbm [thread:$0]  %s526, 4096, %s3, [#allocation4], 256, 256, 16
    $region25: #{tpu_custom_call.1} parent=1 // pred_fallthru
      _
    // Predicated region
    $region26: #{tpu_custom_call.1} parent=1 // pred_check
      _
    $region27: #{tpu_custom_call.1} parent=1 // pred_check_branch
      %533 = sbr.rel (0) target = $region29
    $region28: #{tpu_custom_call.1} parent=1 // pred_region
      %534 = dma.done [#allocation4], 4096
    $region29: #{tpu_custom_call.1} parent=1 // pred_fallthru
      _
    %535 = vsyncpa [#allocation3], 1
    %536 = vsyncpa [#allocation6], 1
    %537 = vsyncpa [#allocation4], 1

</llo_original>
